<compile_context>
chip_gen: v7x
topology: tpu7x:2x2x1
jax: 0.10.0
libtpu: 0.0.40
codegen_flags: <defaults>
</compile_context>

<pallas_src>
import functools

import jax
import jax.numpy as jnp
from jax import lax
from jax.experimental import pallas as pl
from jax.experimental.pallas import tpu as pltpu


# ---------------------------------------------------------------------------
# Hardware-dependent sizing helpers.
# ---------------------------------------------------------------------------

def _lane_pad(n: int) -> int:
    """Round a lane count up to a full 128-lane vreg row."""
    return ((n + 127) // 128) * 128


def _vmem_capacity_bytes() -> int:
    try:
        cap = getattr(pltpu.get_tpu_info(), "vmem_capacity_bytes", None)
        if cap:
            return int(cap)
    except Exception:   # interpret mode / unknown chip
        pass
    return 64 * 1024 * 1024          # conservative: v7x per-core VMEM


def _vmem_limit_bytes() -> int:
    # ~75% of per-core VMEM: ~96 MiB on v5e/v6e (128 MiB), ~48 MiB on v7x (64 MiB).
    return min((3 * _vmem_capacity_bytes()) // 4, 100 * 1024 * 1024)


# ---------------------------------------------------------------------------
# Fast path: lane-dense packed layout + block-diagonal-replicated weights.
# ---------------------------------------------------------------------------

def _choose_pack(obs_dim: int, act_dim: int, hidden_dim: int) -> int:
    """Samples per packed row.  32 makes obs/act slabs lane-dense for typical
    dims; shrink if the replicated block-diagonal weights (O(P^2*D*H) elements)
    would eat too much VMEM."""
    pack = 32
    cap = 12 * 1024 * 1024
    while pack > 4 and pack * pack * hidden_dim * (obs_dim + act_dim + 1) * 4 > cap:
        pack //= 2
    return pack


def _pick_row_tile(num_rows, pack, obs_dim, act_dim, hidden_dim, in_itemsize,
                   weight_bytes, max_rows_cap):
    """Packed-row tile: as large as the per-generation VMEM budget allows, with
    >= 2 grid steps when there is enough work (v7x megacore sharding)."""
    budget = _vmem_limit_bytes()
    row_bytes = (
        2 * (_lane_pad(pack * obs_dim) + _lane_pad(pack * act_dim)) * in_itemsize  # inputs, 2x buf
        + 4 * _lane_pad(pack) * 4                      # out tile (2x buf) + 2nd-layer temps
        + 3 * pack * hidden_dim * 4)                   # hidden-layer f32 temporaries
    avail = budget - 2 * weight_bytes - (4 << 20)      # resident weights + margin
    tr = max(8, min(16384, (max(avail, row_bytes) // row_bytes) // 8 * 8))
    if max_rows_cap is not None:
        tr = min(tr, max(1, max_rows_cap))
    if num_rows <= tr:
        if num_rows >= 16:
            half = (num_rows + 1) // 2                 # >= 2 grid steps, multiple of 8
            tr = ((half + 7) // 8) * 8
        else:
            tr = num_rows
    return max(1, tr)


def _reward_kernel_packed(obs_ref, act_ref, w1o_ref, w1a_ref, b1_ref, w2_ref,
                          b2_ref, out_ref, *, r_min, r_max, neg_slope):
    """Fused MLP on a lane-dense packed tile.

    obs_ref : (TR, P*obs_dim)   P samples packed per row
    act_ref : (TR, P*act_dim)
    w1o_ref : (P*obs_dim, P*H)  kron(I_P, W1_obs)   (block-diagonal)
    w1a_ref : (P*act_dim, P*H)  kron(I_P, W1_act)
    b1_ref  : (1, P*H)          b1 tiled P times
    w2_ref  : (P*H, P)          kron(I_P, w2)
    out_ref : (TR, P)           one reward per packed sample
    """
    h = jnp.dot(obs_ref[...], w1o_ref[...], preferred_element_type=jnp.float32)
    h = h + jnp.dot(act_ref[...], w1a_ref[...], preferred_element_type=jnp.float32)
    h = h + b1_ref[...]
    h = jnp.where(h > 0, h, jnp.float32(neg_slope) * h)            # LeakyReLU
    # Second layer as another block-diagonal MXU matmul (per-sample h . w2).
    # Rows stay independent, so garbage rows of a partial last tile only reach
    # their own (masked) output rows.
    y = jnp.dot(h, w2_ref[...], preferred_element_type=jnp.float32) + b2_ref[...]
    r = jax.nn.sigmoid(y)                                          # [0, 1]
    r = jnp.float32(r_min) + r * jnp.float32(r_max - r_min)
    out_ref[...] = r.astype(out_ref.dtype)


def _forward_packed(obs, act, w1, b1, w2, b2, r_min, r_max, pack, block_rows):
    N, obs_dim = obs.shape
    act_dim = act.shape[-1]
    hidden = w1.shape[1]
    rows = N // pack
    mm_dtype = jnp.bfloat16 if obs.dtype == jnp.dtype(jnp.bfloat16) else jnp.float32

    # Free contiguous HBM-side repack -> lane-dense slabs (no concat / copy of
    # the big activation tensors).
    obs_p = obs.reshape(rows, pack * obs_dim)
    act_p = act.reshape(rows, pack * act_dim)

    # Tiny replicated weights: block-diagonal so each packed sample sees its own
    # copy of W1 / w2.  O(P^2 * D * H) elements -- negligible next to activations.
    eye = jnp.eye(pack, dtype=jnp.float32)
    w1o_big = jnp.kron(eye, jnp.asarray(w1[:obs_dim, :], jnp.float32)).astype(mm_dtype)
    w1a_big = jnp.kron(eye, jnp.asarray(w1[obs_dim:, :], jnp.float32)).astype(mm_dtype)
    w2_big = jnp.kron(eye, jnp.asarray(w2, jnp.float32).reshape(hidden, 1))    # (P*H, P)
    b1_big = jnp.tile(jnp.asarray(b1, jnp.float32).reshape(1, hidden), (1, pack))
    b2_11 = jnp.asarray(b2, jnp.float32).reshape(1, 1)

    in_itemsize = jnp.dtype(obs_p.dtype).itemsize
    weight_bytes = ((w1o_big.size + w1a_big.size) * jnp.dtype(mm_dtype).itemsize
                    + (w2_big.size + b1_big.size + 1) * 4)
    max_rows_cap = None if block_rows is None else max(1, block_rows // pack)
    tr = _pick_row_tile(rows, pack, obs_dim, act_dim, hidden, in_itemsize,
                        weight_bytes, max_rows_cap)
    grid = (pl.cdiv(rows, tr),)

    kernel = functools.partial(_reward_kernel_packed, r_min=float(r_min),
                               r_max=float(r_max), neg_slope=0.01)
    cost = pl.CostEstimate(
        flops=int(2 * N * hidden * (obs_dim + act_dim + 1)),
        transcendentals=int(N),
        bytes_accessed=int(N * (obs_dim + act_dim) * in_itemsize + N * 4 + weight_bytes))

    out = pl.pallas_call(
        kernel,
        out_shape=jax.ShapeDtypeStruct((rows, pack), jnp.float32),
        grid=grid,
        in_specs=[
            pl.BlockSpec((tr, pack * obs_dim), lambda i: (i, 0)),   # obs slab tile
            pl.BlockSpec((tr, pack * act_dim), lambda i: (i, 0)),   # act slab tile
            pl.BlockSpec(w1o_big.shape, lambda i: (0, 0)),          # resident weights
            pl.BlockSpec(w1a_big.shape, lambda i: (0, 0)),
            pl.BlockSpec(b1_big.shape, lambda i: (0, 0)),
            pl.BlockSpec(w2_big.shape, lambda i: (0, 0)),
            pl.BlockSpec((1, 1), lambda i: (0, 0)),
        ],
        out_specs=pl.BlockSpec((tr, pack), lambda i: (i, 0)),
        compiler_params=pltpu.CompilerParams(
            dimension_semantics=("parallel",),
            vmem_limit_bytes=_vmem_limit_bytes()),
        cost_estimate=cost,
    )(obs_p, act_p, w1o_big, w1a_big, b1_big, w2_big, b2_11)

    return out.reshape(N)                  # free contiguous reshape


# ---------------------------------------------------------------------------
# Fallback path (N not divisible by the packing factor): previous narrow-tile
# kernel in the transposed orientation (lane-dense (1, TN) output).
# ---------------------------------------------------------------------------

_NT_DIMS = (((1,), (1,)), ((), ()))        # "A @ B.T": contract minor dims of both


def _reward_kernel_narrow(obs_ref, act_ref, w1o_ref, w1a_ref, b1_ref, w2_ref,
                          b2_ref, out_ref, *, r_min, r_max, neg_slope):
    hT = lax.dot_general(w1o_ref[...], obs_ref[...], _NT_DIMS,
                         preferred_element_type=jnp.float32)          # (H, TN)
    hT = hT + lax.dot_general(w1a_ref[...], act_ref[...], _NT_DIMS,
                              preferred_element_type=jnp.float32)
    hT = hT + b1_ref[...]
    hT = jnp.where(hT > 0, hT, jnp.float32(neg_slope) * hT)           # LeakyReLU
    y = jnp.sum(hT * w2_ref[...], axis=0, keepdims=True) + b2_ref[...]  # VPU layer 2
    r = jax.nn.sigmoid(y)
    r = jnp.float32(r_min) + r * jnp.float32(r_max - r_min)
    out_ref[...] = r.astype(out_ref.dtype)


def _forward_narrow(obs, act, w1, b1, w2, b2, r_min, r_max, block_rows):
    N, obs_dim = obs.shape
    act_dim = act.shape[-1]
    hidden = w1.shape[1]
    mm_dtype = jnp.bfloat16 if obs.dtype == jnp.dtype(jnp.bfloat16) else jnp.float32

    w1o_t = jnp.asarray(w1[:obs_dim, :].T, mm_dtype)                  # (H, obs_dim)
    w1a_t = jnp.asarray(w1[obs_dim:, :].T, mm_dtype)                  # (H, act_dim)
    b1_col = jnp.asarray(b1, jnp.float32).reshape(hidden, 1)
    w2_col = jnp.asarray(w2, jnp.float32).reshape(hidden, 1)
    b2_11 = jnp.asarray(b2, jnp.float32).reshape(1, 1)

    if block_rows is None:
        block_rows = 8192
    if N <= block_rows:
        if N >= 256:                      # >= 2 grid steps so v7x uses both cores
            half = (N + 1) // 2
            tn = ((half + 127) // 128) * 128
        else:
            tn = N
    else:
        tn = max(128, (min(block_rows, 8192) // 128) * 128)
    grid = (pl.cdiv(N, tn),)

    kernel = functools.partial(_reward_kernel_narrow, r_min=float(r_min),
                               r_max=float(r_max), neg_slope=0.01)
    out = pl.pallas_call(
        kernel,
        out_shape=jax.ShapeDtypeStruct((1, N), jnp.float32),
        grid=grid,
        in_specs=[
            pl.BlockSpec((tn, obs_dim), lambda i: (i, 0)),
            pl.BlockSpec((tn, act_dim), lambda i: (i, 0)),
            pl.BlockSpec((hidden, obs_dim), lambda i: (0, 0)),
            pl.BlockSpec((hidden, act_dim), lambda i: (0, 0)),
            pl.BlockSpec((hidden, 1), lambda i: (0, 0)),
            pl.BlockSpec((hidden, 1), lambda i: (0, 0)),
            pl.BlockSpec((1, 1), lambda i: (0, 0)),
        ],
        out_specs=pl.BlockSpec((1, tn), lambda i: (0, i)),
        compiler_params=pltpu.CompilerParams(
            dimension_semantics=("parallel",),
            vmem_limit_bytes=32 * 1024 * 1024),
    )(obs, act, w1o_t, w1a_t, b1_col, w2_col, b2_11)
    return out[0]


# ---------------------------------------------------------------------------
# Public wrapper mirroring RewardModel.forward.
# ---------------------------------------------------------------------------

def reward_model_forward(obs, action, params, *, r_min: float, r_max: float,
                         block_rows=None):
    """JAX/Pallas equivalent of RewardModel.forward.

    `block_rows`, if given, caps the number of samples processed per grid step
    (used by the tests to force multi-tile / ragged-tile configurations).
    """
    w1, b1, w2, b2 = params
    needs_reshape = obs.ndim == 3
    if needs_reshape:
        B, T = obs.shape[:2]
        assert action.ndim == 3 and action.shape[:2] == (B, T)
        obs = obs.reshape(-1, obs.shape[-1])
        action = action.reshape(-1, action.shape[-1])
    assert obs.ndim == 2 and action.ndim == 2
    assert obs.shape[0] == action.shape[0]

    if obs.dtype != action.dtype:
        common = jnp.promote_types(obs.dtype, action.dtype)
        obs, action = obs.astype(common), action.astype(common)
    if obs.dtype not in (jnp.dtype(jnp.bfloat16), jnp.dtype(jnp.float32)):
        obs, action = obs.astype(jnp.float32), action.astype(jnp.float32)

    N, obs_dim = obs.shape
    act_dim = action.shape[-1]
    assert w1.shape[0] == obs_dim + act_dim

    pack = _choose_pack(obs_dim, act_dim, w1.shape[1])
    if N >= pack and N % pack == 0:
        rewards = _forward_packed(obs, action, w1, b1, w2, b2, r_min, r_max,
                                  pack, block_rows)
    else:
        # Correctness fallback for row counts that do not divide the packing
        # factor -- avoids a padded HBM copy of the activations at the cost of
        # less efficient DMAs.
        rewards = _forward_narrow(obs, action, w1, b1, w2, b2, r_min, r_max,
                                  block_rows)

    if needs_reshape:
        rewards = rewards.reshape(B, T)
    return rewards


def init_params(key, obs_dim: int, action_dim: int, hidden_dim: int):
    """Deterministic init matching the layer shapes of the PyTorch module."""
    d_in = obs_dim + action_dim
    k1, k2, k3, k4 = jax.random.split(key, 4)
    bound1 = 1.0 / jnp.sqrt(d_in)
    bound2 = 1.0 / jnp.sqrt(hidden_dim)
    w1 = jax.random.uniform(k1, (d_in, hidden_dim), jnp.float32, -bound1, bound1)
    b1 = jax.random.uniform(k2, (1, hidden_dim), jnp.float32, -bound1, bound1)
    w2 = jax.random.uniform(k3, (hidden_dim, 1), jnp.float32, -bound2, bound2)
    b2 = jax.random.uniform(k4, (1, 1), jnp.float32, -bound2, bound2)
    return (w1, b1, w2, b2)


def _reference_forward(obs, action, params, r_min, r_max):
    """Pure-JAX reference of the same forward, for a correctness check."""
    w1, b1, w2, b2 = params
    reshape = None
    if obs.ndim == 3:
        B, T = obs.shape[:2]
        obs = obs.reshape(-1, obs.shape[-1])
        action = action.reshape(-1, action.shape[-1])
        reshape = (B, T)
    x = jnp.concatenate([obs, action], axis=-1).astype(jnp.float32)
    h = x @ w1 + b1.reshape(1, -1)
    h = jnp.where(h > 0, h, 0.01 * h)
    y = jax.nn.sigmoid(h @ w2 + b2.reshape(1, 1))[:, 0]
    r = r_min + y * (r_max - r_min)
    if reshape is not None:
        r = r.reshape(reshape)
    return r


# TODO(synk): update() (AdamW + Bradley-Terry preference loss/backward) and the
# numpy compute_reward() glue are training/host utilities, not part of the
# forward kernel; only forward() is implemented in Pallas.

if __name__ == "__main__":
    obs_dim, action_dim, hidden_dim = 8, 4, 32
    r_min, r_max = -1.0, 1.0

    key = jax.random.PRNGKey(0)
    kp, k1, k2, k3, k4, k5, k6 = jax.random.split(key, 7)
    params = init_params(kp, obs_dim, action_dim, hidden_dim)

    # 1) 3-D trajectory input, N = B*T = 16 -> narrow fallback path (16 % 32 != 0).
    B, T = 2, 8
    obs = jax.random.normal(k1, (B, T, obs_dim), jnp.float32)
    act = jax.random.normal(k2, (B, T, action_dim), jnp.float32)
    r = jax.block_until_ready(
        reward_model_forward(obs, act, params, r_min=r_min, r_max=r_max))
    ref = _reference_forward(obs, act, params, r_min, r_max)
    assert r.shape == (B, T), r.shape
    assert jnp.allclose(r, ref, atol=5e-5, rtol=1e-5)

    # 2) 3-D input on the packed fast path: N = 4*32 = 128 (single tile).
    B2, T2 = 4, 32
    obs2 = jax.random.normal(k3, (B2, T2, obs_dim), jnp.float32)
    act2 = jax.random.normal(k4, (B2, T2, action_dim), jnp.float32)
    r2 = jax.block_until_ready(
        reward_model_forward(obs2, act2, params, r_min=r_min, r_max=r_max))
    ref2 = _reference_forward(obs2, act2, params, r_min, r_max)
    assert r2.shape == (B2, T2)
    assert jnp.allclose(r2, ref2, atol=5e-5, rtol=1e-5)

    # 3) 2-D packed path, multi-tile with ragged last tile: N=640, 20 packed rows,
    #    block_rows=256 -> 8-row tiles -> grid=(3,), last block partial.
    N3 = 640
    obs3 = jax.random.normal(k5, (N3, obs_dim), jnp.float32)
    act3 = jax.random.normal(k6, (N3, action_dim), jnp.float32)
    r3 = jax.block_until_ready(
        reward_model_forward(obs3, act3, params, r_min=r_min, r_max=r_max,
                             block_rows=256))
    ref3 = _reference_forward(obs3, act3, params, r_min, r_max)
    assert r3.shape == (N3,)
    assert jnp.allclose(r3, ref3, atol=5e-5, rtol=1e-5)

    # 4) 2-D packed path, auto tiling with forced >=2 grid steps (v7x megacore):
    #    N=1024 -> 32 packed rows -> two 16-row tiles.
    obs4 = jax.random.normal(k1, (1024, obs_dim), jnp.float32)
    act4 = jax.random.normal(k2, (1024, action_dim), jnp.float32)
    r4 = jax.block_until_ready(
        reward_model_forward(obs4, act4, params, r_min=r_min, r_max=r_max))
    ref4 = _reference_forward(obs4, act4, params, r_min, r_max)
    assert r4.shape == (1024,)
    assert jnp.allclose(r4, ref4, atol=5e-5, rtol=1e-5)

    print("KERNEL_OK")
</pallas_src>

<mosaic_0001>
module attributes {stable_mosaic.version = 11 : i64} {
  func.func @_reward_kernel_narrow(%arg0: i32, %arg1: memref<16x8xf32, #tpu.memory_space<vmem>>, %arg2: memref<16x4xf32, #tpu.memory_space<vmem>>, %arg3: memref<32x8xf32, #tpu.memory_space<vmem>>, %arg4: memref<32x4xf32, #tpu.memory_space<vmem>>, %arg5: memref<32x1xf32, #tpu.memory_space<vmem>>, %arg6: memref<32x1xf32, #tpu.memory_space<vmem>>, %arg7: memref<1x1xf32, #tpu.memory_space<vmem>>, %arg8: memref<1x16xf32, #tpu.memory_space<vmem>>) attributes {dimension_semantics = [#tpu.dimension_semantics<parallel>], iteration_bounds = array<i64: 1>, scalar_prefetch = 0 : i64, scratch_operands = 0 : i64, tpu.core_type = #tpu.core_type<tc>, window_params = [{transform_indices = @transform_0, window_bounds = array<i64: 16, 8>}, {transform_indices = @transform_1, window_bounds = array<i64: 16, 4>}, {pipeline_mode = #tpu.pipeline_mode<synchronous>, transform_indices = @transform_2, window_bounds = array<i64: 32, 8>}, {pipeline_mode = #tpu.pipeline_mode<synchronous>, transform_indices = @transform_3, window_bounds = array<i64: 32, 4>}, {pipeline_mode = #tpu.pipeline_mode<synchronous>, transform_indices = @transform_4, window_bounds = array<i64: 32, 1>}, {pipeline_mode = #tpu.pipeline_mode<synchronous>, transform_indices = @transform_5, window_bounds = array<i64: 32, 1>}, {pipeline_mode = #tpu.pipeline_mode<synchronous>, transform_indices = @transform_6, window_bounds = array<i64: 1, 1>}, {transform_indices = @transform_7, window_bounds = array<i64: 1, 16>}]} {
    %c0 = arith.constant 0 : index
    %c0_0 = arith.constant 0 : index
    %0 = vector.load %arg3[%c0, %c0_0] : memref<32x8xf32, #tpu.memory_space<vmem>>, vector<32x8xf32>
    %c0_1 = arith.constant 0 : index
    %c0_2 = arith.constant 0 : index
    %1 = vector.load %arg1[%c0_1, %c0_2] : memref<16x8xf32, #tpu.memory_space<vmem>>, vector<16x8xf32>
    %cst = arith.constant dense<0.000000e+00> : vector<32x16xf32>
    %2 = tpu.matmul %0, %1, %cst {dimension_numbers = #tpu.dot_dimension_numbers<[1], [1], [0], [0], [0, 0, 1, 0], [], []>} : vector<32x8xf32>, vector<16x8xf32>, vector<32x16xf32> -> vector<32x16xf32>
    %c0_3 = arith.constant 0 : index
    %c0_4 = arith.constant 0 : index
    %3 = vector.load %arg4[%c0_3, %c0_4] : memref<32x4xf32, #tpu.memory_space<vmem>>, vector<32x4xf32>
    %c0_5 = arith.constant 0 : index
    %c0_6 = arith.constant 0 : index
    %4 = vector.load %arg2[%c0_5, %c0_6] : memref<16x4xf32, #tpu.memory_space<vmem>>, vector<16x4xf32>
    %cst_7 = arith.constant dense<0.000000e+00> : vector<32x16xf32>
    %5 = tpu.matmul %3, %4, %cst_7 {dimension_numbers = #tpu.dot_dimension_numbers<[1], [1], [0], [0], [0, 0, 1, 0], [], []>} : vector<32x4xf32>, vector<16x4xf32>, vector<32x16xf32> -> vector<32x16xf32>
    %6 = arith.addf %2, %5 : vector<32x16xf32>
    %c0_8 = arith.constant 0 : index
    %c0_9 = arith.constant 0 : index
    %7 = vector.load %arg5[%c0_8, %c0_9] : memref<32x1xf32, #tpu.memory_space<vmem>>, vector<32x1xf32>
    %8 = vector.broadcast %7 : vector<32x1xf32> to vector<32x16xf32>
    %9 = arith.addf %6, %8 : vector<32x16xf32>
    %cst_10 = arith.constant 0.000000e+00 : f32
    %10 = vector.broadcast %cst_10 : f32 to vector<32x16xf32>
    %11 = arith.cmpf ogt, %9, %10 : vector<32x16xf32>
    %cst_11 = arith.constant 0.00999999977 : f32
    %12 = vector.broadcast %cst_11 : f32 to vector<32x16xf32>
    %13 = arith.mulf %12, %9 : vector<32x16xf32>
    %14 = arith.select %11, %9, %13 : vector<32x16xi1>, vector<32x16xf32>
    %c0_12 = arith.constant 0 : index
    %c0_13 = arith.constant 0 : index
    %15 = vector.load %arg6[%c0_12, %c0_13] : memref<32x1xf32, #tpu.memory_space<vmem>>, vector<32x1xf32>
    %16 = vector.broadcast %15 : vector<32x1xf32> to vector<32x16xf32>
    %17 = arith.mulf %14, %16 : vector<32x16xf32>
    %cst_14 = arith.constant dense<0.000000e+00> : vector<16xf32>
    %18 = vector.multi_reduction <add>, %17, %cst_14 [0] : vector<32x16xf32> to vector<16xf32>
    %19 = vector.shape_cast %18 : vector<16xf32> to vector<1x16xf32>
    %c0_15 = arith.constant 0 : index
    %c0_16 = arith.constant 0 : index
    %20 = vector.load %arg7[%c0_15, %c0_16] : memref<1x1xf32, #tpu.memory_space<vmem>>, vector<1x1xf32>
    %21 = vector.broadcast %20 : vector<1x1xf32> to vector<1x16xf32>
    %22 = arith.addf %19, %21 : vector<1x16xf32>
    %23 = arith.negf %22 : vector<1x16xf32>
    %24 = math.exp %23 : vector<1x16xf32>
    %cst_17 = arith.constant 1.000000e+00 : f32
    %25 = vector.broadcast %cst_17 : f32 to vector<1x16xf32>
    %26 = arith.addf %25, %24 : vector<1x16xf32>
    %27 = arith.divf %25, %26 : vector<1x16xf32>
    %cst_18 = arith.constant 2.000000e+00 : f32
    %28 = vector.broadcast %cst_18 : f32 to vector<1x16xf32>
    %29 = arith.mulf %27, %28 : vector<1x16xf32>
    %cst_19 = arith.constant -1.000000e+00 : f32
    %30 = vector.broadcast %cst_19 : f32 to vector<1x16xf32>
    %31 = arith.addf %30, %29 : vector<1x16xf32>
    %c0_20 = arith.constant 0 : index
    %c0_21 = arith.constant 0 : index
    %32 = vector.load %arg8[%c0_20, %c0_21] : memref<1x16xf32, #tpu.memory_space<vmem>>, vector<1x16xf32>
    tpu.vector_store %arg8[%c0_20, %c0_21], %31 {strides = array<i32>} : memref<1x16xf32, #tpu.memory_space<vmem>>, vector<1x16xf32>,
    return
  }
  func.func @transform_0(%arg0: i32) -> (i32, i32) {
    %c0_i32 = arith.constant 0 : i32
    %c0_i32_0 = arith.constant 0 : i32
    return %arg0, %c0_i32 : i32, i32
  }
  func.func @transform_1(%arg0: i32) -> (i32, i32) {
    %c0_i32 = arith.constant 0 : i32
    %c0_i32_0 = arith.constant 0 : i32
    return %arg0, %c0_i32 : i32, i32
  }
  func.func @transform_2(%arg0: i32) -> (i32, i32) {
    %c0_i32 = arith.constant 0 : i32
    %c0_i32_0 = arith.constant 0 : i32
    %c0_i32_1 = arith.constant 0 : i32
    return %c0_i32, %c0_i32_0 : i32, i32
  }
  func.func @transform_3(%arg0: i32) -> (i32, i32) {
    %c0_i32 = arith.constant 0 : i32
    %c0_i32_0 = arith.constant 0 : i32
    %c0_i32_1 = arith.constant 0 : i32
    return %c0_i32, %c0_i32_0 : i32, i32
  }
  func.func @transform_4(%arg0: i32) -> (i32, i32) {
    %c0_i32 = arith.constant 0 : i32
    %c0_i32_0 = arith.constant 0 : i32
    %c0_i32_1 = arith.constant 0 : i32
    return %c0_i32, %c0_i32_0 : i32, i32
  }
  func.func @transform_5(%arg0: i32) -> (i32, i32) {
    %c0_i32 = arith.constant 0 : i32
    %c0_i32_0 = arith.constant 0 : i32
    %c0_i32_1 = arith.constant 0 : i32
    return %c0_i32, %c0_i32_0 : i32, i32
  }
  func.func @transform_6(%arg0: i32) -> (i32, i32) {
    %c0_i32 = arith.constant 0 : i32
    %c0_i32_0 = arith.constant 0 : i32
    %c0_i32_1 = arith.constant 0 : i32
    return %c0_i32, %c0_i32_0 : i32, i32
  }
  func.func @transform_7(%arg0: i32) -> (i32, i32) {
    %c0_i32 = arith.constant 0 : i32
    %c0_i32_0 = arith.constant 0 : i32
    return %c0_i32, %arg0 : i32, i32
  }
}

</mosaic_0001>

<llo_original>
// kernel: tpu_custom_call.1
$region0: #{tpu_custom_call.1}
  #allocation0 [shape = 'u32[]', space=smem, size = 0x4, offset = 0x4, fixed_abs, tag = 'smem constant byte address 0x4 - core index']
  #allocation1 [shape = 'u32[144,128]{1,0:T(1,128)}', space=vmem, size = 0x12000, scoped, tag = 'internal scratch']
  #allocation2 [shape = 'f32[1,1]{1,0:T(1,128)S(1)}', space=vmem, size = 0x200, scoped, tag = 'scoped memory for tpu_custom_call.1']
  %s0 = inlined_call_operand.vmem [shape: f32[16,8], index: 0, kind: input, shape index: {}]
  %s1 = inlined_call_operand.vmem [shape: f32[16,4], index: 1, kind: input, shape index: {}]
  %s2 = inlined_call_operand.vmem [shape: f32[32,8], index: 2, kind: input, shape index: {}]
  %s3 = inlined_call_operand.vmem [shape: f32[32,4], index: 3, kind: input, shape index: {}]
  %s4 = inlined_call_operand.vmem [shape: f32[32,1], index: 4, kind: input, shape index: {}]
  %s5 = inlined_call_operand.vmem [shape: f32[32,1], index: 5, kind: input, shape index: {}]
  %s6 = inlined_call_operand.<no memory space> [shape: f32[1,1], index: 6, kind: input, shape index: {}]
  %s7 = inlined_call_operand.hbm [shape: f32[1,16], index: 7, kind: output, shape index: {}]
  %s8 = sld [smem:[#allocation0]]
  $region38: #{tpu_custom_call.1} parent=0
    _
  %s10 = ssub.s32 1, %s8
  %s11 = scalar_select 0, %s10, %s8
  %v12 = vstv %s6
  %13 = vst [vmem:[#allocation2] sm:$0x1] %v12
  $region1: #{tpu_custom_call.1} parent=0
    #allocation3 [shape = 'u8[512]{0}', space=vmem, size = 0x400, scoped, tag = 'output window, operand 0, single buffered']
    #allocation4 [shape = 's32[1]{0}', space=sflag, size = 0x4, scoped, tag = 'scoped memory for tpu_custom_call.1']
    %14 = vsyncpa [#allocation4], 0
    // Predicated region
    $region2: #{tpu_custom_call.1} parent=1 // pred_check
      _
    $region3: #{tpu_custom_call.1} parent=1 // pred_check_branch
      %16 = sbr.rel (0) target = $region5
    $region4: #{tpu_custom_call.1} parent=1 // pred_region
      _
    $region5: #{tpu_custom_call.1} parent=1 // pred_fallthru
      _
    // Predicated region
    $region6: #{tpu_custom_call.1} parent=1 // pred_check
      _
    $region7: #{tpu_custom_call.1} parent=1 // pred_check_branch
      %18 = sbr.rel (0) target = $region9
    $region8: #{tpu_custom_call.1} parent=1 // pred_region
      _
    $region9: #{tpu_custom_call.1} parent=1 // pred_fallthru
      _
    // Predicated region
    $region10: #{tpu_custom_call.1} parent=1 // pred_check
      _
    $region11: #{tpu_custom_call.1} parent=1 // pred_check_branch
      %20 = sbr.rel (0) target = $region13
    $region12: #{tpu_custom_call.1} parent=1 // pred_region
      _
    $region13: #{tpu_custom_call.1} parent=1 // pred_fallthru
      _
    // Predicated region
    $region14: #{tpu_custom_call.1} parent=1 // pred_check
      _
    $region15: #{tpu_custom_call.1} parent=1 // pred_check_branch
      %22 = sbr.rel (0) target = $region17
    $region16: #{tpu_custom_call.1} parent=1 // pred_region
      _
    $region17: #{tpu_custom_call.1} parent=1 // pred_fallthru
      _
    // Predicated region
    $region18: #{tpu_custom_call.1} parent=1 // pred_check
      _
    $region19: #{tpu_custom_call.1} parent=1 // pred_check_branch
      %24 = sbr.rel (0) target = $region21
    $region20: #{tpu_custom_call.1} parent=1 // pred_region
      _
    $region21: #{tpu_custom_call.1} parent=1 // pred_fallthru
      _
    // Predicated region
    $region22: #{tpu_custom_call.1} parent=1 // pred_check
      _
    $region23: #{tpu_custom_call.1} parent=1 // pred_check_branch
      %26 = sbr.rel (0) target = $region25
    $region24: #{tpu_custom_call.1} parent=1 // pred_region
      _
    $region25: #{tpu_custom_call.1} parent=1 // pred_fallthru
      _
    // Predicated region
    $region26: #{tpu_custom_call.1} parent=1 // pred_check
      _
    $region27: #{tpu_custom_call.1} parent=1 // pred_check_branch
      %28 = sbr.rel (0) target = $region29
    $region28: #{tpu_custom_call.1} parent=1 // pred_region
      _
    $region29: #{tpu_custom_call.1} parent=1 // pred_fallthru
      _
    %v29 = vld [vmem:[%s2] sm:$0xff]
    %v30 = vld [vmem:[%s2 + $0x8] sm:$0xff]
    %v31 = vld [vmem:[%s2 + $0x10] sm:$0xff]
    %v32 = vld [vmem:[%s2 + $0x18] sm:$0xff]
    %v33 = vld [vmem:[%s0] sm:$0xff]
    %v34 = vld [vmem:[%s0 + $0x8] sm:$0xff]
    %v35 = vld [vmem:[%s3] sm:$0xff]
    %v36 = vld [vmem:[%s3 + $0x8] sm:$0xff]
    %v37 = vld [vmem:[%s3 + $0x10] sm:$0xff]
    %v38 = vld [vmem:[%s3 + $0x18] sm:$0xff]
    %v39 = vld [vmem:[%s1] sm:$0xff]
    %v40 = vld [vmem:[%s1 + $0x8] sm:$0xff]
    %vm41 = vcmask 31744
    %v43 = vsel %vm41, %v35, 0
    %v46 = vsel %vm41, %v36, 0
    %v49 = vsel %vm41, %v37, 0
    %v52 = vsel %vm41, %v38, 0
    %v55 = vsel %vm41, %v39, 0
    %v58 = vsel %vm41, %v40, 0
    %60 = vmatprep.subr.mxu0 0.0
    %61 = vmatpush1.xpose.msra.mxu0 %v55
    %62 = vmatprep.subr.mxu0 0.0
    %63 = vmatpush1.xpose.msra.mxu0 %v58
    %64 = vmatprep.subr.mxu0 0.0
    %65 = vmatpush1.xpose.msra.mxu0 0.0
    %66 = vmatprep.subr.mxu0 0.0
    %67 = vmatpush1.xpose.msra.mxu0 0.0
    %68 = vmatprep.subr.mxu0 0.0
    %69 = vmatpush1.xpose.msra.mxu0 0.0
    %70 = vmatprep.subr.mxu0 0.0
    %71 = vmatpush1.xpose.msra.mxu0 0.0
    %72 = vmatprep.subr.mxu0 0.0
    %73 = vmatpush1.xpose.msra.mxu0 0.0
    %74 = vmatprep.subr.mxu0 0.0
    %75 = vmatpush1.xpose.msra.mxu0 0.0
    %76 = vmatprep.subr.mxu0 0.0
    %77 = vmatpush1.xpose.msra.mxu0 0.0
    %78 = vmatprep.subr.mxu0 0.0
    %79 = vmatpush1.xpose.msra.mxu0 0.0
    %80 = vmatprep.subr.mxu0 0.0
    %81 = vmatpush1.xpose.msra.mxu0 0.0
    %82 = vmatprep.subr.mxu0 0.0
    %83 = vmatpush1.xpose.msra.mxu0 0.0
    %84 = vmatprep.subr.mxu0 0.0
    %85 = vmatpush1.xpose.msra.mxu0 0.0
    %86 = vmatprep.subr.mxu0 0.0
    %87 = vmatpush1.xpose.msra.mxu0 0.0
    %88 = vmatprep.subr.mxu0 0.0
    %89 = vmatpush1.xpose.msra.mxu0 0.0
    %90 = vmatprep.subr.mxu0 0.0
    %91 = vmatpush1.xpose.msra.mxu0 0.0
    %92 = vmatprep.subr.mxu0 0.0
    %93 = vmatpush1.xpose.msra.mxu0 0.0
    %94 = vmatprep.subr.mxu0 0.0
    %95 = vmatpush1.xpose.msra.mxu0 0.0
    %96 = vmatprep.subr.mxu0 0.0
    %97 = vmatpush1.xpose.msra.mxu0 0.0
    %98 = vmatprep.subr.mxu0 0.0
    %99 = vmatpush1.xpose.msra.mxu0 0.0
    %100 = vmatprep.subr.mxu0 0.0
    %101 = vmatpush1.xpose.msra.mxu0 0.0
    %102 = vmatprep.subr.mxu0 0.0
    %103 = vmatpush1.xpose.msra.mxu0 0.0
    %104 = vmatprep.subr.mxu0 0.0
    %105 = vmatpush1.xpose.msra.mxu0 0.0
    %106 = vmatprep.subr.mxu0 0.0
    %107 = vmatpush1.xpose.msra.mxu0 0.0
    %108 = vmatprep.subr.mxu0 0.0
    %109 = vmatpush1.xpose.msra.mxu0 0.0
    %110 = vmatprep.subr.mxu0 0.0
    %111 = vmatpush1.xpose.msra.mxu0 0.0
    %112 = vmatprep.subr.mxu0 0.0
    %113 = vmatpush1.xpose.msra.mxu0 0.0
    %114 = vmatprep.subr.mxu0 0.0
    %115 = vmatpush1.xpose.msra.mxu0 0.0
    %116 = vmatprep.subr.mxu0 0.0
    %117 = vmatpush1.xpose.msra.mxu0 0.0
    %118 = vmatprep.subr.mxu0 0.0
    %119 = vmatpush1.xpose.msra.mxu0 0.0
    %120 = vmatprep.subr.mxu0 0.0
    %121 = vmatpush1.xpose.msra.mxu0 0.0
    %122 = vmatprep.subr.mxu0 0.0
    %123 = vmatpush1.xpose.msra.mxu0 0.0
    %124 = vmatprep.mubr.f32.mxu0 0.0
    %125 = vmatmul.mubr.f32.gmra.mrb[0].mxu0 %v43
    %v126 = vpop.f32.mrb[0].mxu0
    %v127 = vadd.f32 0.0, %v126
    %v128 = vpop.f32.mrb[0].mxu0
    %129 = vmatprep.mubr.f32.mxu0 0.0
    %130 = vmatmul.mubr.f32.gmra.mrb[0].mxu0 %v46
    %v131 = vpop.f32.mrb[0].mxu0
    %v132 = vadd.f32 0.0, %v131
    %v133 = vpop.f32.mrb[0].mxu0
    %134 = vmatprep.mubr.f32.mxu0 0.0
    %135 = vmatmul.mubr.f32.gmra.mrb[0].mxu0 %v49
    %v136 = vpop.f32.mrb[0].mxu0
    %v137 = vadd.f32 0.0, %v136
    %v138 = vpop.f32.mrb[0].mxu0
    %139 = vmatprep.mubr.f32.mxu0 0.0
    %140 = vmatmul.mubr.f32.gmra.mrb[0].mxu0 %v52
    %v141 = vpop.f32.mrb[0].mxu0
    %v142 = vadd.f32 0.0, %v141
    %v143 = vpop.f32.mrb[0].mxu0
    %144 = vdwg.mxu0
    %vm145 = vcmask 64512
    %v147 = vsel %vm145, %v29, 0
    %v150 = vsel %vm145, %v30, 0
    %v153 = vsel %vm145, %v31, 0
    %v156 = vsel %vm145, %v32, 0
    %v159 = vsel %vm145, %v33, 0
    %v162 = vsel %vm145, %v34, 0
    %164 = vmatprep.subr.mxu0 0.0
    %165 = vmatpush1.xpose.msra.mxu0 %v159
    %166 = vmatprep.subr.mxu0 0.0
    %167 = vmatpush1.xpose.msra.mxu0 %v162
    %168 = vmatprep.subr.mxu0 0.0
    %169 = vmatpush1.xpose.msra.mxu0 0.0
    %170 = vmatprep.subr.mxu0 0.0
    %171 = vmatpush1.xpose.msra.mxu0 0.0
    %172 = vmatprep.subr.mxu0 0.0
    %173 = vmatpush1.xpose.msra.mxu0 0.0
    %174 = vmatprep.subr.mxu0 0.0
    %175 = vmatpush1.xpose.msra.mxu0 0.0
    %176 = vmatprep.subr.mxu0 0.0
    %177 = vmatpush1.xpose.msra.mxu0 0.0
    %178 = vmatprep.subr.mxu0 0.0
    %179 = vmatpush1.xpose.msra.mxu0 0.0
    %180 = vmatprep.subr.mxu0 0.0
    %181 = vmatpush1.xpose.msra.mxu0 0.0
    %182 = vmatprep.subr.mxu0 0.0
    %183 = vmatpush1.xpose.msra.mxu0 0.0
    %184 = vmatprep.subr.mxu0 0.0
    %185 = vmatpush1.xpose.msra.mxu0 0.0
    %186 = vmatprep.subr.mxu0 0.0
    %187 = vmatpush1.xpose.msra.mxu0 0.0
    %188 = vmatprep.subr.mxu0 0.0
    %189 = vmatpush1.xpose.msra.mxu0 0.0
    %190 = vmatprep.subr.mxu0 0.0
    %191 = vmatpush1.xpose.msra.mxu0 0.0
    %192 = vmatprep.subr.mxu0 0.0
    %193 = vmatpush1.xpose.msra.mxu0 0.0
    %194 = vmatprep.subr.mxu0 0.0
    %195 = vmatpush1.xpose.msra.mxu0 0.0
    %196 = vmatprep.subr.mxu0 0.0
    %197 = vmatpush1.xpose.msra.mxu0 0.0
    %198 = vmatprep.subr.mxu0 0.0
    %199 = vmatpush1.xpose.msra.mxu0 0.0
    %200 = vmatprep.subr.mxu0 0.0
    %201 = vmatpush1.xpose.msra.mxu0 0.0
    %202 = vmatprep.subr.mxu0 0.0
    %203 = vmatpush1.xpose.msra.mxu0 0.0
    %204 = vmatprep.subr.mxu0 0.0
    %205 = vmatpush1.xpose.msra.mxu0 0.0
    %206 = vmatprep.subr.mxu0 0.0
    %207 = vmatpush1.xpose.msra.mxu0 0.0
    %208 = vmatprep.subr.mxu0 0.0
    %209 = vmatpush1.xpose.msra.mxu0 0.0
    %210 = vmatprep.subr.mxu0 0.0
    %211 = vmatpush1.xpose.msra.mxu0 0.0
    %212 = vmatprep.subr.mxu0 0.0
    %213 = vmatpush1.xpose.msra.mxu0 0.0
    %214 = vmatprep.subr.mxu0 0.0
    %215 = vmatpush1.xpose.msra.mxu0 0.0
    %216 = vmatprep.subr.mxu0 0.0
    %217 = vmatpush1.xpose.msra.mxu0 0.0
    %218 = vmatprep.subr.mxu0 0.0
    %219 = vmatpush1.xpose.msra.mxu0 0.0
    %220 = vmatprep.subr.mxu0 0.0
    %221 = vmatpush1.xpose.msra.mxu0 0.0
    %222 = vmatprep.subr.mxu0 0.0
    %223 = vmatpush1.xpose.msra.mxu0 0.0
    %224 = vmatprep.subr.mxu0 0.0
    %225 = vmatpush1.xpose.msra.mxu0 0.0
    %226 = vmatprep.subr.mxu0 0.0
    %227 = vmatpush1.xpose.msra.mxu0 0.0
    %228 = vmatprep.mubr.f32.mxu0 0.0
    %229 = vmatmul.mubr.f32.gmra.mrb[0].mxu0 %v147
    %v230 = vpop.f32.mrb[0].mxu0
    %v231 = vadd.f32 %v127, %v230
    %v232 = vpop.f32.mrb[0].mxu0
    %233 = vmatprep.mubr.f32.mxu0 0.0
    %234 = vmatmul.mubr.f32.gmra.mrb[0].mxu0 %v150
    %v235 = vpop.f32.mrb[0].mxu0
    %v236 = vadd.f32 %v132, %v235
    %v237 = vpop.f32.mrb[0].mxu0
    %238 = vmatprep.mubr.f32.mxu0 0.0
    %239 = vmatmul.mubr.f32.gmra.mrb[0].mxu0 %v153
    %v240 = vpop.f32.mrb[0].mxu0
    %v241 = vadd.f32 %v137, %v240
    %v242 = vpop.f32.mrb[0].mxu0
    %243 = vmatprep.mubr.f32.mxu0 0.0
    %244 = vmatmul.mubr.f32.gmra.mrb[0].mxu0 %v156
    %v245 = vpop.f32.mrb[0].mxu0
    %v246 = vadd.f32 %v142, %v245
    %v247 = vpop.f32.mrb[0].mxu0
    %248 = vdwg.mxu0
    %v249 = vld [vmem:[%s4] sm:$0xff]
    %v250 = vld [vmem:[%s4 + $0x8] sm:$0xff]
    %v251 = vld [vmem:[%s4 + $0x10] sm:$0xff]
    %v252 = vld [vmem:[%s4 + $0x18] sm:$0xff]
    %254 = vset.pattern.permute.xlu0 0
    %255 = vperm.xlu0 %254, %v249
    %v256 = vpop.permute.xlu0 %255
    %259 = vset.pattern.permute.xlu0 0
    %260 = vperm.xlu0 %259, %v250
    %v261 = vpop.permute.xlu0 %260
    %264 = vset.pattern.permute.xlu0 0
    %265 = vperm.xlu0 %264, %v251
    %v266 = vpop.permute.xlu0 %265
    %269 = vset.pattern.permute.xlu0 0
    %270 = vperm.xlu0 %269, %v252
    %v271 = vpop.permute.xlu0 %270
    %v273 = vadd.f32 %v231, %v256
    %v274 = vadd.f32 %v236, %v261
    %v275 = vadd.f32 %v241, %v266
    %v276 = vadd.f32 %v246, %v271
    %vm277 = vcmp.gt.f32.partialorder %v273, 0.0
    %vm278 = vcmp.gt.f32.partialorder %v274, 0.0
    %vm279 = vcmp.gt.f32.partialorder %v275, 0.0
    %vm280 = vcmp.gt.f32.partialorder %v276, 0.0
    %v281 = vmul.f32 %v273, 0.01
    %v282 = vmul.f32 %v274, 0.01
    %v283 = vmul.f32 %v275, 0.01
    %v284 = vmul.f32 %v276, 0.01
    %v285 = vsel %vm277, %v273, %v281
    %v286 = vsel %vm278, %v274, %v282
    %v287 = vsel %vm279, %v275, %v283
    %v288 = vsel %vm280, %v276, %v284
    %v289 = vld [vmem:[%s5] sm:$0xff]
    %v290 = vld [vmem:[%s5 + $0x8] sm:$0xff]
    %v291 = vld [vmem:[%s5 + $0x10] sm:$0xff]
    %v292 = vld [vmem:[%s5 + $0x18] sm:$0xff]
    %294 = vset.pattern.permute.xlu0 0
    %295 = vperm.xlu0 %294, %v289
    %v296 = vpop.permute.xlu0 %295
    %299 = vset.pattern.permute.xlu0 0
    %300 = vperm.xlu0 %299, %v290
    %v301 = vpop.permute.xlu0 %300
    %304 = vset.pattern.permute.xlu0 0
    %305 = vperm.xlu0 %304, %v291
    %v306 = vpop.permute.xlu0 %305
    %309 = vset.pattern.permute.xlu0 0
    %310 = vperm.xlu0 %309, %v292
    %v311 = vpop.permute.xlu0 %310
    %v313 = vmul.f32 %v285, %v296
    %v314 = vmul.f32 %v286, %v301
    %v315 = vmul.f32 %v287, %v306
    %v316 = vmul.f32 %v288, %v311
    %vm317 = vcmask 130048
    %v318 = vsel %vm317, %v313, 0.0
    %v319 = vsel %vm317, %v314, 0.0
    %v320 = vadd.f32 %v318, %v319
    %v321 = vsel %vm317, %v315, 0.0
    %v322 = vadd.f32 %v320, %v321
    %v323 = vsel %vm317, %v316, 0.0
    %v324 = vadd.f32 %v322, %v323
    %v325 = vrot.slane %v324, 4
    %v326 = vadd.f32 %v324, %v325
    %v327 = vrot.slane %v326, 2
    %v328 = vadd.f32 %v326, %v327
    %v329 = vrot.slane %v328, 1
    %v330 = vadd.f32 %v328, %v329
    %v331 = vld [vmem:[#allocation2] sm:$0x1]
    %333 = vset.pattern.permute.xlu0 0
    %334 = vperm.xlu0 %333, %v331
    %v335 = vpop.permute.xlu0 %334
    %v337 = vlaneseq
    %v338 = vshrl.u32 %v337, 7
    %v339 = vsub.s32 0, %v338
    %v340 = vrot.slane %v335, %v339
    %v341 = vadd.f32 %v330, %v340
    %v342 = vxor.u32 %v341, 2147483648
    %v343 = vmul.f32 %v342, 1.442695
    %v344 = vpow.pop %v343
    %v345 = vadd.f32 %v344, 1.0
    %v346 = vrcp.pop %v345
    %v347 = vmul.f32 1.0, %v346
    %v348 = vmul.f32 %v347, 2.0
    %v349 = vadd.f32 %v348, -1.0
    %vm350 = vcmask 122880
    %351 = vst.msk [vmem:[#allocation3] sm:$0x1] %vm350, %v349
    // Predicated region
    $region30: #{tpu_custom_call.1} parent=1 // pred_check
      _
    $region31: #{tpu_custom_call.1} parent=1 // pred_check_branch
      %353 = sbr.rel (0) target = $region33
    $region32: #{tpu_custom_call.1} parent=1 // pred_region
      %s355 = ssub.s32 16, 16
      %356 = vsyncadd [#allocation4], %s355
      %s358 = sshll.u32 [#allocation3], 4
      %s359 = int_to_ptr.vmem [resolvable:$true] %s358
      %361 = dma.vmem_to_hbm [thread:$0]  %s359, 16, %s7, [#allocation4]
    $region33: #{tpu_custom_call.1} parent=1 // pred_fallthru
      _
    // Predicated region
    $region34: #{tpu_custom_call.1} parent=1 // pred_check
      _
    $region35: #{tpu_custom_call.1} parent=1 // pred_check_branch
      %363 = sbr.rel (0) target = $region37
    $region36: #{tpu_custom_call.1} parent=1 // pred_region
      %364 = dma.done [#allocation4], 16
    $region37: #{tpu_custom_call.1} parent=1 // pred_fallthru
      _
    %365 = vsyncpa [#allocation4], 1

</llo_original>
